<compile_context>
chip_gen: v7x
topology: tpu7x:2x2x1
jax: 0.10.0
libtpu: 0.0.40
codegen_flags: <defaults>
</compile_context>

<pallas_src>
import functools

import jax
import jax.numpy as jnp
from jax.experimental import pallas as pl
from jax.experimental.pallas import tpu as pltpu

_EPS = 1e-12  # torch.nn.functional.normalize default eps

# VMEM budget for the double-buffered p/z input blocks.  Conservative so the
# same tile is safe on v7x (64 MiB physical VMEM) as well as v5e/v6e (128 MiB).
_INPUT_VMEM_BUDGET = 24 * 1024 * 1024
_VMEM_LIMIT_BYTES = 48 * 1024 * 1024   # explicit scoped-VMEM limit (2x headroom)
_MAX_ROW_TILE = 2048                   # diminishing returns beyond ~1-2K rows


def _round_up(x, m):
    return ((x + m - 1) // m) * m


def _pick_row_tile(n, d, itemsize):
    # 2 inputs * 2 pipeline buffers * row_tile * d * itemsize <= budget
    per_row_bytes = 2 * 2 * d * itemsize
    t = max(8, _INPUT_VMEM_BUDGET // per_row_bytes)
    t = min(t, _MAX_ROW_TILE)
    t = (t // 8) * 8                    # sublane granularity
    t = min(t, _round_up(n, 8))         # never bigger than the (padded) batch
    return max(t, 8)


def _neg_cos_kernel(p_ref, z_ref, o_ref, *, total_n, row_tile):
    """One grid step: row_tile rows of p/z -> one per-block partial cosine sum."""
    i = pl.program_id(0)

    p = p_ref[...].astype(jnp.float32)
    z = z_ref[...].astype(jnp.float32)   # z.detach(): forward value unchanged

    # Per-row squared norms and dot product (lane reductions, once per block).
    sumsq_p = jnp.sum(p * p, axis=1, keepdims=True)    # (TB, 1)
    sumsq_z = jnp.sum(z * z, axis=1, keepdims=True)    # (TB, 1)
    dot = jnp.sum(p * z, axis=1, keepdims=True)        # (TB, 1)

    # F.normalize(x, dim=1): x / max(||x||, eps).  Using
    #   1 / max(||x||, eps) == rsqrt(max(||x||^2, eps^2))
    # avoids two full (TB, D) divides and two normalized temporaries.
    eps_sq = jnp.float32(_EPS * _EPS)
    inv_p = jax.lax.rsqrt(jnp.maximum(sumsq_p, eps_sq))
    inv_z = jax.lax.rsqrt(jnp.maximum(sumsq_z, eps_sq))
    cos = dot * (inv_p * inv_z)                        # (TB, 1)

    # Mask rows past the end of a ragged batch (last block may be padded).
    rows = jax.lax.broadcasted_iota(jnp.int32, (row_tile, 1), 0)
    valid = rows < (total_n - i * row_tile)
    cos = jnp.where(valid, cos, 0.0)

    # Per-block partial sum; final mean / negation happen outside the kernel so
    # the grid axis stays fully "parallel" (uses both TensorCores on v7x).
    part = jnp.sum(cos).astype(jnp.float32)
    o_ref[...] = jnp.broadcast_to(part, (1, 1, 128))


def neg_cosine_loss(p, z, *, row_tile=None):
    """Pallas implementation of D.forward(p, z).  Returns a scalar float32."""
    assert p.shape == z.shape and p.ndim == 2
    n, d = p.shape
    if row_tile is None:
        row_tile = _pick_row_tile(n, d, jnp.dtype(p.dtype).itemsize)
    num_blocks = pl.cdiv(n, row_tile)

    kernel = functools.partial(_neg_cos_kernel, total_n=n, row_tile=row_tile)

    partials = pl.pallas_call(
        kernel,
        out_shape=jax.ShapeDtypeStruct((num_blocks, 1, 128), jnp.float32),
        grid_spec=pltpu.PrefetchScalarGridSpec(
            num_scalar_prefetch=0,
            grid=(num_blocks,),
            in_specs=[
                pl.BlockSpec((row_tile, d), lambda i: (i, 0)),
                pl.BlockSpec((row_tile, d), lambda i: (i, 0)),
            ],
            out_specs=pl.BlockSpec((1, 1, 128), lambda i: (i, 0, 0)),
        ),
        compiler_params=pltpu.CompilerParams(
            dimension_semantics=("parallel",),
            vmem_limit_bytes=_VMEM_LIMIT_BYTES,
        ),
    )(p, z)

    # Tiny epilogue: sum per-block partials, take the mean, negate.
    return -(jnp.sum(partials[:, 0, 0]) / jnp.float32(n))


def _reference(p, z):
    p32 = p.astype(jnp.float32)
    z32 = z.astype(jnp.float32)
    pn = p32 / jnp.maximum(jnp.linalg.norm(p32, axis=1, keepdims=True), _EPS)
    zn = z32 / jnp.maximum(jnp.linalg.norm(z32, axis=1, keepdims=True), _EPS)
    return -jnp.mean(jnp.sum(pn * zn, axis=1))


if __name__ == "__main__":
    key = jax.random.PRNGKey(0)
    kp, kz = jax.random.split(key)

    # Small shapes consistent with the module: batch=16, feature dim=128.
    N, D = 16, 128
    p = jax.random.normal(kp, (N, D), dtype=jnp.float32)
    z = jax.random.normal(kz, (N, D), dtype=jnp.float32)

    loss = jax.block_until_ready(neg_cosine_loss(p, z))
    ref = _reference(p, z)
    assert jnp.allclose(loss, ref, atol=1e-5, rtol=1e-5), (loss, ref)

    # Ragged batch (not a multiple of the tile) exercises the masking path.
    N2 = 20
    p2 = jax.random.normal(kp, (N2, D), dtype=jnp.float32)
    z2 = jax.random.normal(kz, (N2, D), dtype=jnp.float32)
    loss2 = jax.block_until_ready(neg_cosine_loss(p2, z2, row_tile=8))
    ref2 = _reference(p2, z2)
    assert jnp.allclose(loss2, ref2, atol=1e-5, rtol=1e-5), (loss2, ref2)

    print("KERNEL_OK")
</pallas_src>

<mosaic_0001>
module attributes {stable_mosaic.version = 11 : i64} {
  func.func @_neg_cos_kernel(%arg0: i32, %arg1: memref<16x128xf32, #tpu.memory_space<vmem>>, %arg2: memref<16x128xf32, #tpu.memory_space<vmem>>, %arg3: memref<1x1x128xf32, #tpu.memory_space<vmem>>) attributes {dimension_semantics = [#tpu.dimension_semantics<parallel>], iteration_bounds = array<i64: 1>, scalar_prefetch = 0 : i64, scratch_operands = 0 : i64, tpu.core_type = #tpu.core_type<tc>, window_params = [{transform_indices = @transform_0, window_bounds = array<i64: 16, 128>}, {transform_indices = @transform_1, window_bounds = array<i64: 16, 128>}, {transform_indices = @transform_2, window_bounds = array<i64: 1, 1, 128>}]} {
    %c0 = arith.constant 0 : index
    %c0_0 = arith.constant 0 : index
    %0 = vector.load %arg1[%c0, %c0_0] : memref<16x128xf32, #tpu.memory_space<vmem>>, vector<16x128xf32>
    %c0_1 = arith.constant 0 : index
    %c0_2 = arith.constant 0 : index
    %1 = vector.load %arg2[%c0_1, %c0_2] : memref<16x128xf32, #tpu.memory_space<vmem>>, vector<16x128xf32>
    %2 = arith.mulf %0, %0 : vector<16x128xf32>
    %cst = arith.constant dense<0.000000e+00> : vector<16xf32>
    %3 = vector.multi_reduction <add>, %2, %cst [1] : vector<16x128xf32> to vector<16xf32>
    %4 = vector.shape_cast %3 : vector<16xf32> to vector<16x1xf32>
    %5 = arith.mulf %1, %1 : vector<16x128xf32>
    %cst_3 = arith.constant dense<0.000000e+00> : vector<16xf32>
    %6 = vector.multi_reduction <add>, %5, %cst_3 [1] : vector<16x128xf32> to vector<16xf32>
    %7 = vector.shape_cast %6 : vector<16xf32> to vector<16x1xf32>
    %8 = arith.mulf %0, %1 : vector<16x128xf32>
    %cst_4 = arith.constant dense<0.000000e+00> : vector<16xf32>
    %9 = vector.multi_reduction <add>, %8, %cst_4 [1] : vector<16x128xf32> to vector<16xf32>
    %10 = vector.shape_cast %9 : vector<16xf32> to vector<16x1xf32>
    %cst_5 = arith.constant 1.000000e-24 : f32
    %11 = vector.broadcast %cst_5 : f32 to vector<16x1xf32>
    %12 = arith.maximumf %4, %11 : vector<16x1xf32>
    %13 = math.rsqrt %12 : vector<16x1xf32>
    %cst_6 = arith.constant 1.000000e-24 : f32
    %14 = vector.broadcast %cst_6 : f32 to vector<16x1xf32>
    %15 = arith.maximumf %7, %14 : vector<16x1xf32>
    %16 = math.rsqrt %15 : vector<16x1xf32>
    %17 = arith.mulf %13, %16 : vector<16x1xf32>
    %18 = arith.mulf %10, %17 : vector<16x1xf32>
    %19 = tpu.iota {dimensions = array<i32: 0>} : vector<16x1xi32>
    %c16_i32 = arith.constant 16 : i32
    %20 = arith.muli %arg0, %c16_i32 : i32
    %c16_i32_7 = arith.constant 16 : i32
    %21 = arith.subi %c16_i32_7, %20 : i32
    %22 = vector.broadcast %21 : i32 to vector<16x1xi32>
    %23 = arith.cmpi slt, %19, %22 : vector<16x1xi32>
    %cst_8 = arith.constant 0.000000e+00 : f32
    %24 = vector.broadcast %cst_8 : f32 to vector<16x1xf32>
    %25 = arith.select %23, %18, %24 : vector<16x1xi1>, vector<16x1xf32>
    %26 = vector.shape_cast %25 : vector<16x1xf32> to vector<1x16x1xf32>
    %cst_9 = arith.constant dense<0.000000e+00> : vector<1xf32>
    %27 = vector.multi_reduction <add>, %26, %cst_9 [1, 2] : vector<1x16x1xf32> to vector<1xf32>
    %28 = vector.shape_cast %27 : vector<1xf32> to vector<1x1x1xf32>
    %29 = vector.extract %28[0, 0, 0] : f32 from vector<1x1x1xf32>
    %30 = vector.broadcast %29 : f32 to vector<1x1x128xf32>
    %c0_10 = arith.constant 0 : index
    %c0_11 = arith.constant 0 : index
    %c0_12 = arith.constant 0 : index
    %31 = vector.load %arg3[%c0_10, %c0_11, %c0_12] : memref<1x1x128xf32, #tpu.memory_space<vmem>>, vector<1x1x128xf32>
    tpu.vector_store %arg3[%c0_10, %c0_11, %c0_12], %30 {strides = array<i32>} : memref<1x1x128xf32, #tpu.memory_space<vmem>>, vector<1x1x128xf32>,
    return
  }
  func.func @transform_0(%arg0: i32) -> (i32, i32) {
    %c0_i32 = arith.constant 0 : i32
    %c0_i32_0 = arith.constant 0 : i32
    return %arg0, %c0_i32 : i32, i32
  }
  func.func @transform_1(%arg0: i32) -> (i32, i32) {
    %c0_i32 = arith.constant 0 : i32
    %c0_i32_0 = arith.constant 0 : i32
    return %arg0, %c0_i32 : i32, i32
  }
  func.func @transform_2(%arg0: i32) -> (i32, i32, i32) {
    %c0_i32 = arith.constant 0 : i32
    %c0_i32_0 = arith.constant 0 : i32
    %c0_i32_1 = arith.constant 0 : i32
    return %arg0, %c0_i32, %c0_i32_0 : i32, i32, i32
  }
}

</mosaic_0001>

<llo_original>
// kernel: tpu_custom_call.1
$region0: #{tpu_custom_call.1}
  #allocation0 [shape = 'u32[]', space=smem, size = 0x4, offset = 0x4, fixed_abs, tag = 'smem constant byte address 0x4 - core index']
  #allocation1 [shape = 'u32[144,128]{1,0:T(1,128)}', space=vmem, size = 0x12000, scoped, tag = 'internal scratch']
  %s0 = inlined_call_operand.hbm [shape: f32[16,128], index: 0, kind: input, shape index: {}]
  %s1 = inlined_call_operand.hbm [shape: f32[16,128], index: 1, kind: input, shape index: {}]
  %s2 = inlined_call_operand.hbm [shape: f32[1,1,128], index: 2, kind: output, shape index: {}]
  %s3 = sld [smem:[#allocation0]]
  $region26: #{tpu_custom_call.1} parent=0
    _
  %s5 = ssub.s32 1, %s3
  %s6 = scalar_select 0, %s5, %s3
  $region1: #{tpu_custom_call.1} parent=0
    #allocation2 [shape = 'u8[8192]{0}', space=vmem, size = 0x2000, scoped, tag = 'input window, operand 0, single buffered']
    #allocation3 [shape = 's32[1]{0}', space=sflag, size = 0x4, scoped, tag = 'scoped memory for tpu_custom_call.1']
    #allocation4 [shape = 's32[1]{0}', space=sflag, size = 0x4, scoped, tag = 'scoped memory for tpu_custom_call.1']
    #allocation5 [shape = 'u8[8192]{0}', space=vmem, size = 0x2000, scoped, tag = 'input window, operand 1, single buffered']
    #allocation6 [shape = 's32[1]{0}', space=sflag, size = 0x4, scoped, tag = 'scoped memory for tpu_custom_call.1']
    #allocation7 [shape = 'u8[512]{0}', space=vmem, size = 0x400, scoped, tag = 'output window, operand 0, single buffered']
    %7 = vsyncpa [#allocation3], 0
    %8 = vsyncpa [#allocation6], 0
    %9 = vsyncpa [#allocation4], 0
    // Predicated region
    $region2: #{tpu_custom_call.1} parent=1 // pred_check
      _
    $region3: #{tpu_custom_call.1} parent=1 // pred_check_branch
      %11 = sbr.rel (0) target = $region5
    $region4: #{tpu_custom_call.1} parent=1 // pred_region
      %s13 = ssub.s32 256, 256
      %14 = vsyncadd [#allocation3], %s13
      %s15 = sshll.u32 [#allocation2], 4
      %s16 = int_to_ptr.vmem [resolvable:$true] %s15
      %21 = dma.hbm_to_vmem [thread:$0]  %s0, 256, %s16, [#allocation3], 128, 128, 8
    $region5: #{tpu_custom_call.1} parent=1 // pred_fallthru
      _
    // Predicated region
    $region6: #{tpu_custom_call.1} parent=1 // pred_check
      _
    $region7: #{tpu_custom_call.1} parent=1 // pred_check_branch
      %23 = sbr.rel (0) target = $region9
    $region8: #{tpu_custom_call.1} parent=1 // pred_region
      %s25 = ssub.s32 256, 256
      %26 = vsyncadd [#allocation6], %s25
      %s27 = sshll.u32 [#allocation5], 4
      %s28 = int_to_ptr.vmem [resolvable:$true] %s27
      %33 = dma.hbm_to_vmem [thread:$0]  %s1, 256, %s28, [#allocation6], 128, 128, 8
    $region9: #{tpu_custom_call.1} parent=1 // pred_fallthru
      _
    // Predicated region
    $region10: #{tpu_custom_call.1} parent=1 // pred_check
      _
    $region11: #{tpu_custom_call.1} parent=1 // pred_check_branch
      %35 = sbr.rel (0) target = $region13
    $region12: #{tpu_custom_call.1} parent=1 // pred_region
      %36 = dma.done [#allocation3], 256
    $region13: #{tpu_custom_call.1} parent=1 // pred_fallthru
      _
    // Predicated region
    $region14: #{tpu_custom_call.1} parent=1 // pred_check
      _
    $region15: #{tpu_custom_call.1} parent=1 // pred_check_branch
      %38 = sbr.rel (0) target = $region17
    $region16: #{tpu_custom_call.1} parent=1 // pred_region
      %39 = dma.done [#allocation6], 256
    $region17: #{tpu_custom_call.1} parent=1 // pred_fallthru
      _
    %v40 = vld [vmem:[#allocation2] sm:$0xff]
    %v41 = vld [vmem:[#allocation2 + $0x8] sm:$0xff]
    %v42 = vld [vmem:[#allocation5] sm:$0xff]
    %v43 = vld [vmem:[#allocation5 + $0x8] sm:$0xff]
    %v44 = vmul.f32 %v40, %v40
    %v45 = vmul.f32 %v41, %v41
    %46 = vadd.xlane.f32.xlu0 %v44
    %v47 = vpop.xlane.xlu0 %46
    %48 = vadd.xlane.f32.xlu0 %v45
    %v49 = vpop.xlane.xlu0 %48
    %v50 = vmul.f32 %v42, %v42
    %v51 = vmul.f32 %v43, %v43
    %52 = vadd.xlane.f32.xlu0 %v50
    %v53 = vpop.xlane.xlu0 %52
    %54 = vadd.xlane.f32.xlu0 %v51
    %v55 = vpop.xlane.xlu0 %54
    %v56 = vmul.f32 %v40, %v42
    %v57 = vmul.f32 %v41, %v43
    %58 = vadd.xlane.f32.xlu0 %v56
    %v59 = vpop.xlane.xlu0 %58
    %60 = vadd.xlane.f32.xlu0 %v57
    %v61 = vpop.xlane.xlu0 %60
    %v62 = vmax.f32 %v47, 1e-24
    %v63 = vmax.f32 %v49, 1e-24
    %v64 = vrsqrt.pop %v62
    %v65 = vrsqrt.pop %v63
    %v66 = vmax.f32 %v53, 1e-24
    %v67 = vmax.f32 %v55, 1e-24
    %v68 = vrsqrt.pop %v66
    %v69 = vrsqrt.pop %v67
    %v70 = vmul.f32 %v64, %v68
    %v71 = vmul.f32 %v65, %v69
    %v72 = vmul.f32 %v59, %v70
    %v73 = vmul.f32 %v61, %v71
    %v74 = vlaneseq
    %v75 = vshrl.u32 %v74, 7
    %v76 = vadd.s32 %v75, 8
    %s77 = smul.u32 0, 16
    %s78 = ssub.s32 16, %s77
    %v79 = vstv %s78
    %vm80 = vcmp.lt.s32.totalorder %v75, %v79
    %vm81 = vcmp.lt.s32.totalorder %v76, %v79
    %v82 = vsel %vm80, %v72, 0.0
    %v83 = vsel %vm81, %v73, 0.0
    %vm84 = vcmask 7168
    %v85 = vsel %vm84, %v82, 0.0
    %v86 = vsel %vm84, %v83, 0.0
    %v87 = vadd.f32 %v85, %v86
    %88 = vadd.xlane.f32.xlu0 %v87
    %v89 = vpop.xlane.xlu0 %88
    %v90 = vrot.slane %v89, 4
    %v91 = vadd.f32 %v89, %v90
    %v92 = vrot.slane %v91, 2
    %v93 = vadd.f32 %v91, %v92
    %v94 = vrot.slane %v93, 1
    %v95 = vadd.f32 %v93, %v94
    %s96 = vtos %v95
    %v97 = vstv %s96
    %98 = vst [vmem:[#allocation7] sm:$0x1] %v97
    // Predicated region
    $region18: #{tpu_custom_call.1} parent=1 // pred_check
      _
    $region19: #{tpu_custom_call.1} parent=1 // pred_check_branch
      %100 = sbr.rel (0) target = $region21
    $region20: #{tpu_custom_call.1} parent=1 // pred_region
      %s102 = ssub.s32 16, 16
      %103 = vsyncadd [#allocation4], %s102
      %s105 = sshll.u32 [#allocation7], 4
      %s106 = int_to_ptr.vmem [resolvable:$true] %s105
      %108 = dma.vmem_to_hbm [thread:$0]  %s106, 16, %s2, [#allocation4]
    $region21: #{tpu_custom_call.1} parent=1 // pred_fallthru
      _
    // Predicated region
    $region22: #{tpu_custom_call.1} parent=1 // pred_check
      _
    $region23: #{tpu_custom_call.1} parent=1 // pred_check_branch
      %110 = sbr.rel (0) target = $region25
    $region24: #{tpu_custom_call.1} parent=1 // pred_region
      %111 = dma.done [#allocation4], 16
    $region25: #{tpu_custom_call.1} parent=1 // pred_fallthru
      _
    %112 = vsyncpa [#allocation3], 1
    %113 = vsyncpa [#allocation6], 1
    %114 = vsyncpa [#allocation4], 1

</llo_original>
